<compile_context>
chip_gen: v5e
topology: v5e:2x2
jax: 0.10.0
libtpu: 0.0.40
codegen_flags: <defaults>
</compile_context>

<pallas_src>
import jax
import jax.numpy as jnp
from jax.experimental import pallas as pl
from jax.experimental.pallas import tpu as pltpu


PACK = 8        # logical rows packed per physical (lane-dense) row
TILE_R = 4096   # packed rows per grid step  (= 32768 logical rows per step)


def myrnn_forward(x, params, *, pack=PACK, tile_r=TILE_R):
    """x: (B, input_size) float32 -> (B, 1, output_size) float32."""
    B, in_size = x.shape
    hid = params["w_ih_l0"].shape[0]
    out_size = params["w_lin"].shape[0]

    # ---- glue (plain JAX; constant-folded / hoisted under jit) -------------
    # Fold b_hh into b_ih (exact: seq_len == 1, h_init == 0) and pre-transpose
    # so the kernel computes x @ W (+ b), matching PyTorch's x @ W^T + b.
    w0t = params["w_ih_l0"].T                               # (in,  hid)
    w1t = params["w_ih_l1"].T                               # (hid, hid)
    wlt = params["w_lin"].T                                 # (hid, out)
    b0 = params["b_ih_l0"] + params["b_hh_l0"]              # (hid,)
    b1 = params["b_ih_l1"] + params["b_hh_l1"]              # (hid,)
    bl = params["b_lin"]                                    # (out,)

    # Batch packing: PACK logical rows per physical row; weights replicated
    # block-diagonally so the packed matmul is mathematically identical.
    bd0 = jax.scipy.linalg.block_diag(*([w0t] * pack))      # (in*P,  hid*P)
    bd1 = jax.scipy.linalg.block_diag(*([w1t] * pack))      # (hid*P, hid*P)
    bdl = jax.scipy.linalg.block_diag(*([wlt] * pack))      # (hid*P, out*P)
    ip, hp, op = in_size * pack, hid * pack, out_size * pack
    bw = max(hp, op)
    biases = jnp.zeros((3, bw), jnp.float32)                # one consolidated
    biases = biases.at[0, :hp].set(jnp.tile(b0, pack))      # bias input
    biases = biases.at[1, :hp].set(jnp.tile(b1, pack))
    biases = biases.at[2, :op].set(jnp.tile(bl, pack))

    # Pad batch up to a multiple of PACK; then (B,20)->(R, 20*P) is a free
    # row-major re-view (no data movement).
    B_pad = ((B + pack - 1) // pack) * pack
    if B_pad != B:
        x = jnp.pad(x, ((0, B_pad - B), (0, 0)))
    R = B_pad // pack
    xp = x.reshape(R, ip)

    # Block either divides by 8 (tile_r is a multiple of 8) or equals the full
    # extent R; the last partial grid tile is masked by Pallas on writeback.
    tr = min(tile_r, R)
    grid = (pl.cdiv(R, tr),)

    def kernel(x_ref, w0_ref, w1_ref, wl_ref, b_ref, out_ref):
        xb = x_ref[...]                                      # (tr, in*P)
        # biases broadcast exactly once per tile (no inner loop)
        b0b = b_ref[0:1, :hp]                                # (1, hid*P)
        b1b = b_ref[1:2, :hp]                                # (1, hid*P)
        blb = b_ref[2:3, :op]                                # (1, out*P)
        # RNN layer 0: h0 = tanh(x @ W_ih0^T + b_ih0 + b_hh0)
        h0 = jnp.tanh(jnp.dot(xb, w0_ref[...],
                              preferred_element_type=jnp.float32) + b0b)
        # RNN layer 1: h1 = tanh(h0 @ W_ih1^T + b_ih1 + b_hh1)
        h1 = jnp.tanh(jnp.dot(h0, w1_ref[...],
                              preferred_element_type=jnp.float32) + b1b)
        # Final Linear: pred = h1 @ W_lin^T + b_lin
        out_ref[...] = jnp.dot(h1, wl_ref[...],
                               preferred_element_type=jnp.float32) + blb

    weight_bytes = 4 * (ip * hp + hp * hp + hp * op + 3 * bw)
    cost = pl.CostEstimate(
        flops=2 * R * (ip * hp + hp * hp + hp * op),
        transcendentals=2 * R * hp,
        bytes_accessed=4 * R * (ip + op) + weight_bytes,
    )

    out_packed = pl.pallas_call(
        kernel,
        out_shape=jax.ShapeDtypeStruct((R, op), jnp.float32),
        grid=grid,
        in_specs=[
            pl.BlockSpec((tr, ip), lambda i: (i, 0)),        # x: streamed/pipelined
            pl.BlockSpec((ip, hp), lambda i: (0, 0)),        # weights: resident,
            pl.BlockSpec((hp, hp), lambda i: (0, 0)),        #   DMA'd once
            pl.BlockSpec((hp, op), lambda i: (0, 0)),
            pl.BlockSpec((3, bw), lambda i: (0, 0)),         # consolidated biases
        ],
        out_specs=pl.BlockSpec((tr, op), lambda i: (i, 0)),
        compiler_params=pltpu.CompilerParams(
            dimension_semantics=("parallel",),   # v7x: shard batch over 2 TCs
            vmem_limit_bytes=32 * 1024 * 1024,   # v7x-safe (64 MiB physical)
        ),
        cost_estimate=cost,
    )(xp, bd0, bd1, bdl, biases)

    out = out_packed.reshape(B_pad, out_size)[:B]
    # PyTorch returns (B, 1, output_size) because of input.view(-1, 1, input_size)
    return out.reshape(B, 1, out_size)


def init_params(key, input_size=20, hidden=3, output_size=20):
    """Deterministic init matching PyTorch's default U(-1/sqrt(H), 1/sqrt(H))."""
    ks = jax.random.split(key, 10)
    bound = 1.0 / jnp.sqrt(float(hidden))
    u = lambda k, shape: jax.random.uniform(k, shape, jnp.float32, -bound, bound)
    return {
        "w_ih_l0": u(ks[0], (hidden, input_size)),
        "w_hh_l0": u(ks[1], (hidden, hidden)),   # unused at runtime (h_init == 0)
        "b_ih_l0": u(ks[2], (hidden,)),
        "b_hh_l0": u(ks[3], (hidden,)),
        "w_ih_l1": u(ks[4], (hidden, hidden)),
        "w_hh_l1": u(ks[5], (hidden, hidden)),   # unused at runtime (h_init == 0)
        "b_ih_l1": u(ks[6], (hidden,)),
        "b_hh_l1": u(ks[7], (hidden,)),
        "w_lin":   u(ks[8], (output_size, hidden)),
        "b_lin":   u(ks[9], (output_size,)),
    }


def reference(x, params):
    """Pure-JAX reference of myRNN.forward (seq_len=1, zero init hidden)."""
    h0 = jnp.tanh(x @ params["w_ih_l0"].T + params["b_ih_l0"] + params["b_hh_l0"])
    h1 = jnp.tanh(h0 @ params["w_ih_l1"].T + params["b_ih_l1"] + params["b_hh_l1"])
    return (h1 @ params["w_lin"].T + params["b_lin"]).reshape(x.shape[0], 1, -1)


if __name__ == "__main__":
    key = jax.random.PRNGKey(0)
    kp, k1, k2, k3 = jax.random.split(key, 4)

    INPUT, HIDDEN, OUT = 20, 3, 20
    params = init_params(kp, INPUT, HIDDEN, OUT)

    # Three small cases:
    #   B=8   : single grid tile (tile == full extent)
    #   B=13  : ragged batch -> padded to a multiple of PACK in the wrapper
    #   B=200 : small tile_r override -> multi-step grid with a partial tail
    cases = [(8, TILE_R, k1), (13, TILE_R, k2), (200, 8, k3)]
    for B, tr, kk in cases:
        x = jax.random.normal(kk, (B, INPUT), jnp.float32)
        pred = myrnn_forward(x, params, tile_r=tr)
        jax.block_until_ready(pred)
        ref = reference(x, params)
        assert pred.shape == (B, 1, OUT), pred.shape
        err = float(jnp.abs(pred - ref).max())
        assert err < 1e-5, err

    print("KERNEL_OK")
</pallas_src>

<mosaic_0001>
module attributes {stable_mosaic.version = 11 : i64} {
  func.func @kernel(%arg0: i32, %arg1: memref<1x160xf32, #tpu.memory_space<vmem>>, %arg2: memref<160x24xf32, #tpu.memory_space<vmem>>, %arg3: memref<24x24xf32, #tpu.memory_space<vmem>>, %arg4: memref<24x160xf32, #tpu.memory_space<vmem>>, %arg5: memref<3x160xf32, #tpu.memory_space<vmem>>, %arg6: memref<1x160xf32, #tpu.memory_space<vmem>>) attributes {dimension_semantics = [#tpu.dimension_semantics<parallel>], iteration_bounds = array<i64: 1>, scalar_prefetch = 0 : i64, scratch_operands = 0 : i64, tpu.core_type = #tpu.core_type<tc>, window_params = [{transform_indices = @transform_0, window_bounds = array<i64: 1, 160>}, {pipeline_mode = #tpu.pipeline_mode<synchronous>, transform_indices = @transform_1, window_bounds = array<i64: 160, 24>}, {pipeline_mode = #tpu.pipeline_mode<synchronous>, transform_indices = @transform_2, window_bounds = array<i64: 24, 24>}, {pipeline_mode = #tpu.pipeline_mode<synchronous>, transform_indices = @transform_3, window_bounds = array<i64: 24, 160>}, {pipeline_mode = #tpu.pipeline_mode<synchronous>, transform_indices = @transform_4, window_bounds = array<i64: 3, 160>}, {transform_indices = @transform_5, window_bounds = array<i64: 1, 160>}]} {
    %c0 = arith.constant 0 : index
    %c0_0 = arith.constant 0 : index
    %0 = vector.load %arg1[%c0, %c0_0] : memref<1x160xf32, #tpu.memory_space<vmem>>, vector<1x160xf32>
    %c0_1 = arith.constant 0 : index
    %c0_2 = arith.constant 0 : index
    %1 = vector.load %arg5[%c0_1, %c0_2] : memref<3x160xf32, #tpu.memory_space<vmem>>, vector<1x24xf32>
    %c1 = arith.constant 1 : index
    %c0_3 = arith.constant 0 : index
    %2 = vector.load %arg5[%c1, %c0_3] : memref<3x160xf32, #tpu.memory_space<vmem>>, vector<1x24xf32>
    %c2 = arith.constant 2 : index
    %c0_4 = arith.constant 0 : index
    %3 = vector.load %arg5[%c2, %c0_4] : memref<3x160xf32, #tpu.memory_space<vmem>>, vector<1x160xf32>
    %c0_5 = arith.constant 0 : index
    %c0_6 = arith.constant 0 : index
    %4 = vector.load %arg2[%c0_5, %c0_6] : memref<160x24xf32, #tpu.memory_space<vmem>>, vector<160x24xf32>
    %cst = arith.constant dense<0.000000e+00> : vector<1x24xf32>
    %5 = tpu.matmul %0, %4, %cst {dimension_numbers = #tpu.dot_dimension_numbers<[1], [0], [0], [1], [0, 0, 1, 1], [], []>} : vector<1x160xf32>, vector<160x24xf32>, vector<1x24xf32> -> vector<1x24xf32>
    %6 = arith.addf %5, %1 : vector<1x24xf32>
    %7 = math.tanh %6 : vector<1x24xf32>
    %c0_7 = arith.constant 0 : index
    %c0_8 = arith.constant 0 : index
    %8 = vector.load %arg3[%c0_7, %c0_8] : memref<24x24xf32, #tpu.memory_space<vmem>>, vector<24x24xf32>
    %cst_9 = arith.constant dense<0.000000e+00> : vector<1x24xf32>
    %9 = tpu.matmul %7, %8, %cst_9 {dimension_numbers = #tpu.dot_dimension_numbers<[1], [0], [0], [1], [0, 0, 1, 1], [], []>} : vector<1x24xf32>, vector<24x24xf32>, vector<1x24xf32> -> vector<1x24xf32>
    %10 = arith.addf %9, %2 : vector<1x24xf32>
    %11 = math.tanh %10 : vector<1x24xf32>
    %c0_10 = arith.constant 0 : index
    %c0_11 = arith.constant 0 : index
    %12 = vector.load %arg4[%c0_10, %c0_11] : memref<24x160xf32, #tpu.memory_space<vmem>>, vector<24x160xf32>
    %cst_12 = arith.constant dense<0.000000e+00> : vector<1x160xf32>
    %13 = tpu.matmul %11, %12, %cst_12 {dimension_numbers = #tpu.dot_dimension_numbers<[1], [0], [0], [1], [0, 0, 1, 1], [], []>} : vector<1x24xf32>, vector<24x160xf32>, vector<1x160xf32> -> vector<1x160xf32>
    %14 = arith.addf %13, %3 : vector<1x160xf32>
    %c0_13 = arith.constant 0 : index
    %c0_14 = arith.constant 0 : index
    %15 = vector.load %arg6[%c0_13, %c0_14] : memref<1x160xf32, #tpu.memory_space<vmem>>, vector<1x160xf32>
    tpu.vector_store %arg6[%c0_13, %c0_14], %14 {strides = array<i32>} : memref<1x160xf32, #tpu.memory_space<vmem>>, vector<1x160xf32>,
    return
  }
  func.func @transform_0(%arg0: i32) -> (i32, i32) {
    %c0_i32 = arith.constant 0 : i32
    %c0_i32_0 = arith.constant 0 : i32
    return %arg0, %c0_i32 : i32, i32
  }
  func.func @transform_1(%arg0: i32) -> (i32, i32) {
    %c0_i32 = arith.constant 0 : i32
    %c0_i32_0 = arith.constant 0 : i32
    %c0_i32_1 = arith.constant 0 : i32
    return %c0_i32, %c0_i32_0 : i32, i32
  }
  func.func @transform_2(%arg0: i32) -> (i32, i32) {
    %c0_i32 = arith.constant 0 : i32
    %c0_i32_0 = arith.constant 0 : i32
    %c0_i32_1 = arith.constant 0 : i32
    return %c0_i32, %c0_i32_0 : i32, i32
  }
  func.func @transform_3(%arg0: i32) -> (i32, i32) {
    %c0_i32 = arith.constant 0 : i32
    %c0_i32_0 = arith.constant 0 : i32
    %c0_i32_1 = arith.constant 0 : i32
    return %c0_i32, %c0_i32_0 : i32, i32
  }
  func.func @transform_4(%arg0: i32) -> (i32, i32) {
    %c0_i32 = arith.constant 0 : i32
    %c0_i32_0 = arith.constant 0 : i32
    %c0_i32_1 = arith.constant 0 : i32
    return %c0_i32, %c0_i32_0 : i32, i32
  }
  func.func @transform_5(%arg0: i32) -> (i32, i32) {
    %c0_i32 = arith.constant 0 : i32
    %c0_i32_0 = arith.constant 0 : i32
    return %arg0, %c0_i32 : i32, i32
  }
}

</mosaic_0001>

<llo_original>
// kernel: tpu_custom_call.1
$region0: #{tpu_custom_call.1}
  #allocation0 [shape = 'u32[]', space=smem, size = 0x4, offset = 0x4, fixed_abs, tag = 'smem constant byte address 0x4 - core index']
  #allocation1 [shape = 'u32[72,128]{1,0:T(1,128)}', space=vmem, size = 0x9000, scoped, tag = 'internal scratch']
  %s0 = inlined_call_operand.vmem [shape: f32[1,160], index: 0, kind: input, shape index: {}]
  %s1 = inlined_call_operand.vmem [shape: f32[160,24], index: 1, kind: input, shape index: {}]
  %s2 = inlined_call_operand.vmem [shape: f32[24,24], index: 2, kind: input, shape index: {}]
  %s3 = inlined_call_operand.vmem [shape: f32[24,160], index: 3, kind: input, shape index: {}]
  %s4 = inlined_call_operand.vmem [shape: f32[3,160], index: 4, kind: input, shape index: {}]
  %s5 = inlined_call_operand.hbm [shape: f32[1,160], index: 5, kind: output, shape index: {}]
  %s6 = sld [smem:[#allocation0]]
  $region30: #{tpu_custom_call.1} parent=0
    _
  %s8 = ssub.s32 1, %s6
  %s9 = scalar_select 0, %s8, %s6
  $region1: #{tpu_custom_call.1} parent=0
    #allocation2 [shape = 'u8[1024]{0}', space=vmem, size = 0x400, scoped, tag = 'output window, operand 0, single buffered']
    #allocation3 [shape = 's32[1]{0}', space=sflag, size = 0x4, scoped, tag = 'scoped memory for tpu_custom_call.1']
    %10 = vsyncpa [#allocation3], 0
    // Predicated region
    $region2: #{tpu_custom_call.1} parent=1 // pred_check
      _
    $region3: #{tpu_custom_call.1} parent=1 // pred_check_branch
      %12 = sbr.rel (0) target = $region5
    $region4: #{tpu_custom_call.1} parent=1 // pred_region
      _
    $region5: #{tpu_custom_call.1} parent=1 // pred_fallthru
      _
    // Predicated region
    $region6: #{tpu_custom_call.1} parent=1 // pred_check
      _
    $region7: #{tpu_custom_call.1} parent=1 // pred_check_branch
      %14 = sbr.rel (0) target = $region9
    $region8: #{tpu_custom_call.1} parent=1 // pred_region
      _
    $region9: #{tpu_custom_call.1} parent=1 // pred_fallthru
      _
    // Predicated region
    $region10: #{tpu_custom_call.1} parent=1 // pred_check
      _
    $region11: #{tpu_custom_call.1} parent=1 // pred_check_branch
      %16 = sbr.rel (0) target = $region13
    $region12: #{tpu_custom_call.1} parent=1 // pred_region
      _
    $region13: #{tpu_custom_call.1} parent=1 // pred_fallthru
      _
    // Predicated region
    $region14: #{tpu_custom_call.1} parent=1 // pred_check
      _
    $region15: #{tpu_custom_call.1} parent=1 // pred_check_branch
      %18 = sbr.rel (0) target = $region17
    $region16: #{tpu_custom_call.1} parent=1 // pred_region
      _
    $region17: #{tpu_custom_call.1} parent=1 // pred_fallthru
      _
    // Predicated region
    $region18: #{tpu_custom_call.1} parent=1 // pred_check
      _
    $region19: #{tpu_custom_call.1} parent=1 // pred_check_branch
      %20 = sbr.rel (0) target = $region21
    $region20: #{tpu_custom_call.1} parent=1 // pred_region
      _
    $region21: #{tpu_custom_call.1} parent=1 // pred_fallthru
      _
    %v21 = vld [vmem:[%s0] sm:$0x3]
    %v22 = vld [vmem:[%s4] sm:$0x1]
    %v23 = vld [vmem:[%s4 + $0x1] sm:$0x1]
    %s24 = scalar_lea.vmem %s4, 2
    %v25 = vld [vmem:[%s24] ss:$4 sm:$0x3]
    %v26 = vld [vmem:[%s1] sm:$0xff]
    %v27 = vld [vmem:[%s1 + $0x8] sm:$0xff]
    %v28 = vld [vmem:[%s1 + $0x10] sm:$0xff]
    %v29 = vld [vmem:[%s1 + $0x18] sm:$0xff]
    %v30 = vld [vmem:[%s1 + $0x20] sm:$0xff]
    %v31 = vld [vmem:[%s1 + $0x28] sm:$0xff]
    %v32 = vld [vmem:[%s1 + $0x30] sm:$0xff]
    %v33 = vld [vmem:[%s1 + $0x38] sm:$0xff]
    %v34 = vld [vmem:[%s1 + $0x40] sm:$0xff]
    %v35 = vld [vmem:[%s1 + $0x48] sm:$0xff]
    %v36 = vld [vmem:[%s1 + $0x50] sm:$0xff]
    %v37 = vld [vmem:[%s1 + $0x58] sm:$0xff]
    %v38 = vld [vmem:[%s1 + $0x60] sm:$0xff]
    %v39 = vld [vmem:[%s1 + $0x68] sm:$0xff]
    %v40 = vld [vmem:[%s1 + $0x70] sm:$0xff]
    %v41 = vld [vmem:[%s1 + $0x78] sm:$0xff]
    %v42 = vld [vmem:[%s1 + $0x80] sm:$0xff]
    %v43 = vld [vmem:[%s1 + $0x88] sm:$0xff]
    %v44 = vld [vmem:[%s1 + $0x90] sm:$0xff]
    %v45 = vld [vmem:[%s1 + $0x98] sm:$0xff]
    %v47 = vperm.slane %v21, 0
    %v48 = vperm.slane %v21, 1
    %vm50 = vcmask 261120
    %v51 = vsel %vm50, %v48, 0
    %53 = vmatpush.msra.mxu0 %v41
    %54 = vmatpush.msra.mxu0 %v40
    %55 = vmatpush.msra.mxu0 %v39
    %56 = vmatpush.msra.mxu0 %v38
    %57 = vmatpush.msra.mxu0 %v37
    %58 = vmatpush.msra.mxu0 %v36
    %59 = vmatpush.msra.mxu0 %v35
    %60 = vmatpush.msra.mxu0 %v34
    %61 = vmatpush.msra.mxu0 %v33
    %62 = vmatpush.msra.mxu0 %v32
    %63 = vmatpush.msra.mxu0 %v31
    %64 = vmatpush.msra.mxu0 %v30
    %65 = vmatpush.msra.mxu0 %v29
    %66 = vmatpush.msra.mxu0 %v28
    %67 = vmatpush.msra.mxu0 %v27
    %68 = vmatpush.msra.mxu0 %v26
    %69 = vmatmul.f32.gmra.mxu0 %v47
    %v70 = vpop.f32.mrf.mxu0
    %v71 = vadd.f32 %v22, %v70
    %72 = vdwg.mxu0
    %73 = vmatpush.msra.mxu0 0.0
    %74 = vmatpush.msra.mxu0 0.0
    %75 = vmatpush.msra.mxu0 0.0
    %76 = vmatpush.msra.mxu0 0.0
    %77 = vmatpush.msra.mxu0 0.0
    %78 = vmatpush.msra.mxu0 0.0
    %79 = vmatpush.msra.mxu0 0.0
    %80 = vmatpush.msra.mxu0 0.0
    %81 = vmatpush.msra.mxu0 0.0
    %82 = vmatpush.msra.mxu0 0.0
    %83 = vmatpush.msra.mxu0 0.0
    %84 = vmatpush.msra.mxu0 0.0
    %85 = vmatpush.msra.mxu0 %v45
    %86 = vmatpush.msra.mxu0 %v44
    %87 = vmatpush.msra.mxu0 %v43
    %88 = vmatpush.msra.mxu0 %v42
    %89 = vmatmul.f32.gmra.mxu0 %v51
    %v90 = vpop.f32.mrf.mxu0
    %v91 = vadd.f32 %v71, %v90
    %92 = vdwg.mxu0
    %v93 = vtanh.pop %v91
    %v94 = vld [vmem:[%s2] sm:$0xff]
    %v95 = vld [vmem:[%s2 + $0x8] sm:$0xff]
    %v96 = vld [vmem:[%s2 + $0x10] sm:$0xff]
    %vm97 = vcmask 195584
    %v99 = vsel %vm97, %v93, 0
    %101 = vmatpush.msra.mxu0 0.0
    %102 = vmatpush.msra.mxu0 0.0
    %103 = vmatpush.msra.mxu0 0.0
    %104 = vmatpush.msra.mxu0 0.0
    %105 = vmatpush.msra.mxu0 0.0
    %106 = vmatpush.msra.mxu0 0.0
    %107 = vmatpush.msra.mxu0 0.0
    %108 = vmatpush.msra.mxu0 0.0
    %109 = vmatpush.msra.mxu0 0.0
    %110 = vmatpush.msra.mxu0 0.0
    %111 = vmatpush.msra.mxu0 0.0
    %112 = vmatpush.msra.mxu0 0.0
    %113 = vmatpush.msra.mxu0 0.0
    %114 = vmatpush.msra.mxu0 %v96
    %115 = vmatpush.msra.mxu0 %v95
    %116 = vmatpush.msra.mxu0 %v94
    %117 = vmatmul.f32.gmra.mxu0 %v99
    %v118 = vpop.f32.mrf.mxu0
    %v119 = vadd.f32 %v23, %v118
    %120 = vdwg.mxu0
    %v121 = vtanh.pop %v119
    %v122 = vld [vmem:[%s3] sm:$0xff]
    %v123 = vld [vmem:[%s3 + $0x8] sm:$0xff]
    %v124 = vld [vmem:[%s3 + $0x10] sm:$0xff]
    %v125 = vld [vmem:[%s3 + $0x18] sm:$0xff]
    %v126 = vld [vmem:[%s3 + $0x20] sm:$0xff]
    %v127 = vld [vmem:[%s3 + $0x28] sm:$0xff]
    %v129 = vperm.slane %v25, 0
    %v130 = vperm.slane %v25, 1
    %v134 = vsel %vm97, %v121, 0
    %136 = vmatpush.msra.mxu0 0.0
    %137 = vmatpush.msra.mxu0 0.0
    %138 = vmatpush.msra.mxu0 0.0
    %139 = vmatpush.msra.mxu0 0.0
    %140 = vmatpush.msra.mxu0 0.0
    %141 = vmatpush.msra.mxu0 0.0
    %142 = vmatpush.msra.mxu0 0.0
    %143 = vmatpush.msra.mxu0 0.0
    %144 = vmatpush.msra.mxu0 0.0
    %145 = vmatpush.msra.mxu0 0.0
    %146 = vmatpush.msra.mxu0 0.0
    %147 = vmatpush.msra.mxu0 0.0
    %148 = vmatpush.msra.mxu0 0.0
    %149 = vmatpush.msra.mxu0 %v126
    %150 = vmatpush.msra.mxu0 %v124
    %151 = vmatpush.msra.mxu0 %v122
    %152 = vmatmul.f32.gmra.mxu0 %v134
    %v153 = vpop.f32.mrf.mxu0
    %v154 = vadd.f32 %v129, %v153
    %155 = vdwg.mxu0
    %156 = vmatpush.msra.mxu0 0.0
    %157 = vmatpush.msra.mxu0 0.0
    %158 = vmatpush.msra.mxu0 0.0
    %159 = vmatpush.msra.mxu0 0.0
    %160 = vmatpush.msra.mxu0 0.0
    %161 = vmatpush.msra.mxu0 0.0
    %162 = vmatpush.msra.mxu0 0.0
    %163 = vmatpush.msra.mxu0 0.0
    %164 = vmatpush.msra.mxu0 0.0
    %165 = vmatpush.msra.mxu0 0.0
    %166 = vmatpush.msra.mxu0 0.0
    %167 = vmatpush.msra.mxu0 0.0
    %168 = vmatpush.msra.mxu0 0.0
    %169 = vmatpush.msra.mxu0 %v127
    %170 = vmatpush.msra.mxu0 %v125
    %171 = vmatpush.msra.mxu0 %v123
    %172 = vmatmul.f32.gmra.mxu0 %v134
    %v173 = vpop.f32.mrf.mxu0
    %v174 = vadd.f32 %v130, %v173
    %175 = vdwg.mxu0
    %v178 = vrot.slane %v174, 7
    %vm179 = vcmask 1040384
    %v180 = vsel %vm179, %v154, %v178
    %v182 = vlaneseq
    %vm183 = vcmp.ge.s32.totalorder %v182, 0
    %vm184 = vcmp.lt.s32.totalorder %v182, 160
    %vm185 = vmand %vm183, %vm184
    %186 = vst.msk [vmem:[#allocation2] sm:$0x3] %vm185, %v180
    // Predicated region
    $region22: #{tpu_custom_call.1} parent=1 // pred_check
      _
    $region23: #{tpu_custom_call.1} parent=1 // pred_check_branch
      %188 = sbr.rel (0) target = $region25
    $region24: #{tpu_custom_call.1} parent=1 // pred_region
      %190 = vsyncadd [#allocation3], 0
      %s192 = sshll.u32 [#allocation2], 4
      %s193 = int_to_ptr.vmem [resolvable:$true] %s192
      %s194 = sshll.u32 %s5, 4
      %s195 = int_to_ptr.hbm [resolvable:$true] %s194
      %197 = dma.vmem_to_hbm [thread:$0]  %s193, 32, %s195, [#allocation3]
    $region25: #{tpu_custom_call.1} parent=1 // pred_fallthru
      _
    // Predicated region
    $region26: #{tpu_custom_call.1} parent=1 // pred_check
      _
    $region27: #{tpu_custom_call.1} parent=1 // pred_check_branch
      %199 = sbr.rel (0) target = $region29
    $region28: #{tpu_custom_call.1} parent=1 // pred_region
      %201 = dma.done [#allocation3], 32
    $region29: #{tpu_custom_call.1} parent=1 // pred_fallthru
      _
    %202 = vsyncpa [#allocation3], 1

</llo_original>
